<compile_context>
chip_gen: v6e
topology: v6e:2x2x1
jax: 0.10.0
libtpu: 0.0.40
codegen_flags: <defaults>
</compile_context>

<pallas_src>
import functools

import jax
import jax.numpy as jnp
from jax.experimental import pallas as pl
from jax.experimental.pallas import tpu as pltpu

_BN_EPS = 1e-5
_SOFTPLUS_THRESH = 20.0  # matches F.softplus default threshold


def _choose_l_tile(L, cin, cout, vmem_budget_bytes=8 << 20):
    """Largest 128-multiple divisor of L whose double-buffered f32 working set fits budget."""
    per_lane_bytes = 4 * 2 * (cin + cout)          # f32 in+out tiles, double-buffered
    cap = max(128, (vmem_budget_bytes // per_lane_bytes) // 128 * 128)
    best = 0
    t = 128
    limit = min(L, cap)
    while t <= limit:
        if L % t == 0:
            best = t
        t += 128
    return best if best else L                      # full-L fallback is always legal


# --------------------- pass 1: input statistics (sum + Gram) ---------------------

def _stats_kernel(x_ref, sumx_ref, gram_ref):
    # x_ref: (1, Cin, TL)   sumx_ref: (Cin, 1)   gram_ref: (Cin, Cin)
    @pl.when((pl.program_id(0) == 0) & (pl.program_id(1) == 0))
    def _():
        sumx_ref[...] = jnp.zeros_like(sumx_ref)
        gram_ref[...] = jnp.zeros_like(gram_ref)

    x = x_ref[0].astype(jnp.float32)                       # (Cin, TL)
    sumx_ref[...] += jnp.sum(x, axis=1, keepdims=True)     # XLU reduce (free slot)
    # G += x @ x^T on the MXU (contract over the lane axis, no explicit transpose).
    gram_ref[...] += jax.lax.dot_general(
        x, x, dimension_numbers=(((1,), (1,)), ((), ())),
        preferred_element_type=jnp.float32)


# ----------------- pass 2: folded (conv+BN) matmul + Mish, per tile ---------------

def _apply_kernel(w_ref, b_ref, x_ref, o_ref, *, active):
    # w_ref: (Cout, Cin) BN-folded weight   b_ref: (Cout, 1) BN-folded bias
    # x_ref: (1, Cin, TL)                   o_ref: (1, Cout, TL)
    x = x_ref[0].astype(jnp.float32)                                    # (Cin, TL)
    y = jnp.dot(w_ref[...], x, preferred_element_type=jnp.float32) + b_ref[...]
    if active:
        # Mish(y) = y * tanh(softplus(y)); with t = 1 + exp(y),
        # tanh(log(t)) = (t*t - 1) / (t*t + 1).  One EUP exp + one approx reciprocal.
        t = 1.0 + jnp.exp(jnp.minimum(y, _SOFTPLUS_THRESH))
        t2 = t * t
        y = y * (t2 - 1.0) * pl.reciprocal(t2 + 1.0, approx=True)
    o_ref[0] = y.astype(o_ref.dtype)


# ------------------------------------ wrapper -------------------------------------

@functools.partial(jax.jit, static_argnames=("active",))
def basic_conv1d(x, conv_weight, bn_gamma, bn_beta, *, active=True):
    """x: (N, C_in, L); conv_weight: (C_out, C_in, 1). Returns (N, C_out, L) f32."""
    N, Cin, L = x.shape
    Cout = conv_weight.shape[0]
    TL = _choose_l_tile(L, Cin, Cout)
    grid = (N, L // TL)
    ibytes = jnp.dtype(x.dtype).itemsize

    w = conv_weight.reshape(Cout, Cin).astype(jnp.float32)
    x_spec = pl.BlockSpec((1, Cin, TL), lambda n, l: (n, 0, l))  # native NCL, lane-dense

    # ---- pass 1: accumulate sum(x) and the Cin x Cin Gram matrix over all (N, L) ----
    sumx, gram = pl.pallas_call(
        _stats_kernel,
        out_shape=(
            jax.ShapeDtypeStruct((Cin, 1), jnp.float32),
            jax.ShapeDtypeStruct((Cin, Cin), jnp.float32),
        ),
        grid=grid,
        in_specs=[x_spec],
        out_specs=(
            pl.BlockSpec((Cin, 1), lambda n, l: (0, 0)),     # grid-resident accumulator
            pl.BlockSpec((Cin, Cin), lambda n, l: (0, 0)),   # grid-resident accumulator
        ),
        compiler_params=pltpu.CompilerParams(
            dimension_semantics=("arbitrary", "arbitrary")),
        cost_estimate=pl.CostEstimate(
            flops=(2 * Cin * Cin + Cin) * N * L,
            transcendentals=0,
            bytes_accessed=Cin * N * L * ibytes),
    )(x)

    # ---- tiny (C_out-sized) BN statistics, then fold BN scale/shift into the conv ----
    count = jnp.float32(N * L)
    mean = (w @ sumx) / count                                        # (Cout, 1)
    e_y2 = jnp.sum((w @ gram) * w, axis=1, keepdims=True) / count    # diag(W G W^T)/n
    var = e_y2 - mean * mean                                         # biased (training mode)
    scale = bn_gamma.reshape(Cout, 1) * jax.lax.rsqrt(var + _BN_EPS)
    w_folded = scale * w                                             # (Cout, Cin)
    b_folded = bn_beta.reshape(Cout, 1) - mean * scale               # (Cout, 1)

    # ---- pass 2: per-tile folded matmul + Mish, embarrassingly parallel -------------
    out = pl.pallas_call(
        functools.partial(_apply_kernel, active=active),
        out_shape=jax.ShapeDtypeStruct((N, Cout, L), jnp.float32),
        grid=grid,
        in_specs=[
            pl.BlockSpec((Cout, Cin), lambda n, l: (0, 0)),  # grid-resident params
            pl.BlockSpec((Cout, 1), lambda n, l: (0, 0)),
            x_spec,
        ],
        out_specs=pl.BlockSpec((1, Cout, TL), lambda n, l: (n, 0, l)),
        compiler_params=pltpu.CompilerParams(
            dimension_semantics=("parallel", "parallel")),   # megacore-shardable on v7x
        cost_estimate=pl.CostEstimate(
            flops=(2 * Cout * Cin + 8 * Cout) * N * L,
            transcendentals=(2 * Cout * N * L) if active else 0,
            bytes_accessed=Cin * N * L * ibytes + Cout * N * L * 4),
    )(w_folded, b_folded, x)

    return out


# ------------------------------- pure-JAX reference -------------------------------

def _reference(x, conv_weight, bn_gamma, bn_beta, active=True):
    w = conv_weight.reshape(conv_weight.shape[0], -1)
    y = jnp.einsum("oc,ncl->nol", w, x)                              # conv1d k=1
    mean = jnp.mean(y, axis=(0, 2), keepdims=True)
    var = jnp.mean((y - mean) ** 2, axis=(0, 2), keepdims=True)      # biased
    y = (y - mean) * jax.lax.rsqrt(var + _BN_EPS)
    y = y * bn_gamma.reshape(1, -1, 1) + bn_beta.reshape(1, -1, 1)
    if active:
        sp = jnp.where(y > _SOFTPLUS_THRESH, y,
                       jnp.log1p(jnp.exp(jnp.minimum(y, _SOFTPLUS_THRESH))))
        y = y * jnp.tanh(sp)
    return y


if __name__ == "__main__":
    key = jax.random.PRNGKey(0)
    k_x, k_w, k_x2 = jax.random.split(key, 3)

    # Small shapes consistent with the module: batch=2, in=4, out=8, length=16.
    N, Cin, Cout, L = 2, 4, 8, 16
    x = jax.random.normal(k_x, (N, Cin, L), dtype=jnp.float32)

    # Conv1d weight (C_out, C_in, kernel_size=1), no bias; BN affine init (1, 0).
    bound = 1.0 / (Cin ** 0.5)
    conv_weight = jax.random.uniform(
        k_w, (Cout, Cin, 1), dtype=jnp.float32, minval=-bound, maxval=bound)
    bn_gamma = jnp.ones((Cout,), dtype=jnp.float32)
    bn_beta = jnp.zeros((Cout,), dtype=jnp.float32)

    out = basic_conv1d(x, conv_weight, bn_gamma, bn_beta, active=True)
    out = jax.block_until_ready(out)
    assert out.shape == (N, Cout, L), out.shape
    ref = _reference(x, conv_weight, bn_gamma, bn_beta, active=True)
    assert jnp.allclose(out, ref, rtol=1e-2, atol=1e-2), float(jnp.max(jnp.abs(out - ref)))

    # Second check exercising the 128-lane tiled path and active=False.
    L2 = 256
    x2 = jax.random.normal(k_x2, (N, Cin, L2), dtype=jnp.float32)
    out2 = jax.block_until_ready(
        basic_conv1d(x2, conv_weight, bn_gamma, bn_beta, active=False))
    ref2 = _reference(x2, conv_weight, bn_gamma, bn_beta, active=False)
    assert jnp.allclose(out2, ref2, rtol=1e-2, atol=1e-2), float(jnp.max(jnp.abs(out2 - ref2)))

    print("KERNEL_OK")
</pallas_src>

<mosaic_0001>
module attributes {stable_mosaic.version = 11 : i64} {
  func.func @_stats_kernel(%arg0: i32, %arg1: i32, %arg2: memref<1x4x16xf32, #tpu.memory_space<vmem>>, %arg3: memref<4x1xf32, #tpu.memory_space<vmem>>, %arg4: memref<4x4xf32, #tpu.memory_space<vmem>>) attributes {dimension_semantics = [#tpu.dimension_semantics<arbitrary>, #tpu.dimension_semantics<arbitrary>], iteration_bounds = array<i64: 2, 1>, scalar_prefetch = 0 : i64, scratch_operands = 0 : i64, tpu.core_type = #tpu.core_type<tc>, window_params = [{transform_indices = @transform_0, window_bounds = array<i64: 1, 4, 16>}, {pipeline_mode = #tpu.pipeline_mode<synchronous>, transform_indices = @transform_1, window_bounds = array<i64: 4, 1>}, {pipeline_mode = #tpu.pipeline_mode<synchronous>, transform_indices = @transform_2, window_bounds = array<i64: 4, 4>}]} {
    %c0_i32 = arith.constant 0 : i32
    %0 = arith.cmpi eq, %arg0, %c0_i32 : i32
    %c0_i32_0 = arith.constant 0 : i32
    %1 = arith.cmpi eq, %arg1, %c0_i32_0 : i32
    %2 = arith.andi %0, %1 : i1
    %3 = arith.extui %2 : i1 to i32
    %c0_i32_1 = arith.constant 0 : i32
    %4 = arith.cmpi ne, %3, %c0_i32_1 : i32
    scf.if %4 {
      %cst_13 = arith.constant 0.000000e+00 : f32
      %16 = vector.broadcast %cst_13 : f32 to vector<4x1xf32>
      %c0_14 = arith.constant 0 : index
      %c0_15 = arith.constant 0 : index
      %17 = vector.load %arg3[%c0_14, %c0_15] : memref<4x1xf32, #tpu.memory_space<vmem>>, vector<4x1xf32>
      tpu.vector_store %arg3[%c0_14, %c0_15], %16 {strides = array<i32>} : memref<4x1xf32, #tpu.memory_space<vmem>>, vector<4x1xf32>,
      %cst_16 = arith.constant 0.000000e+00 : f32
      %18 = vector.broadcast %cst_16 : f32 to vector<4x4xf32>
      %c0_17 = arith.constant 0 : index
      %c0_18 = arith.constant 0 : index
      %19 = vector.load %arg4[%c0_17, %c0_18] : memref<4x4xf32, #tpu.memory_space<vmem>>, vector<4x4xf32>
      tpu.vector_store %arg4[%c0_17, %c0_18], %18 {strides = array<i32>} : memref<4x4xf32, #tpu.memory_space<vmem>>, vector<4x4xf32>,
    } else {
    }
    %c0 = arith.constant 0 : index
    %c0_2 = arith.constant 0 : index
    %c0_3 = arith.constant 0 : index
    %5 = vector.load %arg2[%c0, %c0_2, %c0_3] : memref<1x4x16xf32, #tpu.memory_space<vmem>>, vector<1x4x16xf32>
    %6 = vector.shape_cast %5 : vector<1x4x16xf32> to vector<4x16xf32>
    %c0_4 = arith.constant 0 : index
    %c0_5 = arith.constant 0 : index
    %7 = vector.load %arg3[%c0_4, %c0_5] : memref<4x1xf32, #tpu.memory_space<vmem>>, vector<4x1xf32>
    %cst = arith.constant dense<0.000000e+00> : vector<4xf32>
    %8 = vector.multi_reduction <add>, %6, %cst [1] : vector<4x16xf32> to vector<4xf32>
    %9 = vector.shape_cast %8 : vector<4xf32> to vector<4x1xf32>
    %10 = arith.addf %7, %9 : vector<4x1xf32>
    %c0_6 = arith.constant 0 : index
    %c0_7 = arith.constant 0 : index
    %11 = vector.load %arg3[%c0_6, %c0_7] : memref<4x1xf32, #tpu.memory_space<vmem>>, vector<4x1xf32>
    tpu.vector_store %arg3[%c0_6, %c0_7], %10 {strides = array<i32>} : memref<4x1xf32, #tpu.memory_space<vmem>>, vector<4x1xf32>,
    %c0_8 = arith.constant 0 : index
    %c0_9 = arith.constant 0 : index
    %12 = vector.load %arg4[%c0_8, %c0_9] : memref<4x4xf32, #tpu.memory_space<vmem>>, vector<4x4xf32>
    %cst_10 = arith.constant dense<0.000000e+00> : vector<4x4xf32>
    %13 = tpu.matmul %6, %6, %cst_10 {dimension_numbers = #tpu.dot_dimension_numbers<[1], [1], [0], [0], [0, 0, 1, 0], [], []>} : vector<4x16xf32>, vector<4x16xf32>, vector<4x4xf32> -> vector<4x4xf32>
    %14 = arith.addf %12, %13 : vector<4x4xf32>
    %c0_11 = arith.constant 0 : index
    %c0_12 = arith.constant 0 : index
    %15 = vector.load %arg4[%c0_11, %c0_12] : memref<4x4xf32, #tpu.memory_space<vmem>>, vector<4x4xf32>
    tpu.vector_store %arg4[%c0_11, %c0_12], %14 {strides = array<i32>} : memref<4x4xf32, #tpu.memory_space<vmem>>, vector<4x4xf32>,
    return
  }
  func.func @transform_0(%arg0: i32, %arg1: i32) -> (i32, i32, i32) {
    %c0_i32 = arith.constant 0 : i32
    %c0_i32_0 = arith.constant 0 : i32
    return %arg0, %c0_i32, %arg1 : i32, i32, i32
  }
  func.func @transform_1(%arg0: i32, %arg1: i32) -> (i32, i32) {
    %c0_i32 = arith.constant 0 : i32
    %c0_i32_0 = arith.constant 0 : i32
    %c0_i32_1 = arith.constant 0 : i32
    return %c0_i32, %c0_i32_0 : i32, i32
  }
  func.func @transform_2(%arg0: i32, %arg1: i32) -> (i32, i32) {
    %c0_i32 = arith.constant 0 : i32
    %c0_i32_0 = arith.constant 0 : i32
    %c0_i32_1 = arith.constant 0 : i32
    return %c0_i32, %c0_i32_0 : i32, i32
  }
}

module attributes {stable_mosaic.version = 11 : i64} {
  func.func @_apply_kernel(%arg0: i32, %arg1: i32, %arg2: memref<8x4xf32, #tpu.memory_space<vmem>>, %arg3: memref<8x1xf32, #tpu.memory_space<vmem>>, %arg4: memref<1x4x16xf32, #tpu.memory_space<vmem>>, %arg5: memref<1x8x16xf32, #tpu.memory_space<vmem>>) attributes {dimension_semantics = [#tpu.dimension_semantics<parallel>, #tpu.dimension_semantics<parallel>], iteration_bounds = array<i64: 2, 1>, scalar_prefetch = 0 : i64, scratch_operands = 0 : i64, tpu.core_type = #tpu.core_type<tc>, window_params = [{pipeline_mode = #tpu.pipeline_mode<synchronous>, transform_indices = @transform_0, window_bounds = array<i64: 8, 4>}, {pipeline_mode = #tpu.pipeline_mode<synchronous>, transform_indices = @transform_1, window_bounds = array<i64: 8, 1>}, {transform_indices = @transform_2, window_bounds = array<i64: 1, 4, 16>}, {transform_indices = @transform_3, window_bounds = array<i64: 1, 8, 16>}]} {
    %c0 = arith.constant 0 : index
    %c0_0 = arith.constant 0 : index
    %c0_1 = arith.constant 0 : index
    %0 = vector.load %arg4[%c0, %c0_0, %c0_1] : memref<1x4x16xf32, #tpu.memory_space<vmem>>, vector<1x4x16xf32>
    %1 = vector.shape_cast %0 : vector<1x4x16xf32> to vector<4x16xf32>
    %c0_2 = arith.constant 0 : index
    %c0_3 = arith.constant 0 : index
    %2 = vector.load %arg2[%c0_2, %c0_3] : memref<8x4xf32, #tpu.memory_space<vmem>>, vector<8x4xf32>
    %cst = arith.constant dense<0.000000e+00> : vector<8x16xf32>
    %3 = tpu.matmul %2, %1, %cst {dimension_numbers = #tpu.dot_dimension_numbers<[1], [0], [0], [1], [0, 0, 1, 1], [], []>} : vector<8x4xf32>, vector<4x16xf32>, vector<8x16xf32> -> vector<8x16xf32>
    %c0_4 = arith.constant 0 : index
    %c0_5 = arith.constant 0 : index
    %4 = vector.load %arg3[%c0_4, %c0_5] : memref<8x1xf32, #tpu.memory_space<vmem>>, vector<8x1xf32>
    %5 = vector.broadcast %4 : vector<8x1xf32> to vector<8x16xf32>
    %6 = arith.addf %3, %5 : vector<8x16xf32>
    %cst_6 = arith.constant 2.000000e+01 : f32
    %7 = vector.broadcast %cst_6 : f32 to vector<8x16xf32>
    %8 = arith.minimumf %6, %7 : vector<8x16xf32>
    %9 = math.exp %8 : vector<8x16xf32>
    %cst_7 = arith.constant 1.000000e+00 : f32
    %10 = vector.broadcast %cst_7 : f32 to vector<8x16xf32>
    %11 = arith.addf %10, %9 : vector<8x16xf32>
    %12 = arith.mulf %11, %11 : vector<8x16xf32>
    %cst_8 = arith.constant 1.000000e+00 : f32
    %13 = vector.broadcast %cst_8 : f32 to vector<8x16xf32>
    %14 = arith.subf %12, %13 : vector<8x16xf32>
    %15 = arith.mulf %6, %14 : vector<8x16xf32>
    %cst_9 = arith.constant 1.000000e+00 : f32
    %16 = vector.broadcast %cst_9 : f32 to vector<8x16xf32>
    %17 = arith.addf %12, %16 : vector<8x16xf32>
    %18 = tpu.reciprocal %17 {approx = true} : vector<8x16xf32> -> vector<8x16xf32>
    %19 = arith.mulf %15, %18 : vector<8x16xf32>
    %c0_10 = arith.constant 0 : index
    %c0_11 = arith.constant 0 : index
    %c0_12 = arith.constant 0 : index
    %20 = vector.load %arg5[%c0_10, %c0_11, %c0_12] : memref<1x8x16xf32, #tpu.memory_space<vmem>>, vector<1x8x16xf32>
    %21 = vector.shape_cast %20 : vector<1x8x16xf32> to vector<8x16xf32>
    %22 = vector.shape_cast %19 : vector<8x16xf32> to vector<1x8x16xf32>
    tpu.vector_store %arg5[%c0_10, %c0_11, %c0_12], %22 {strides = array<i32>} : memref<1x8x16xf32, #tpu.memory_space<vmem>>, vector<1x8x16xf32>,
    return
  }
  func.func @transform_0(%arg0: i32, %arg1: i32) -> (i32, i32) {
    %c0_i32 = arith.constant 0 : i32
    %c0_i32_0 = arith.constant 0 : i32
    %c0_i32_1 = arith.constant 0 : i32
    return %c0_i32, %c0_i32_0 : i32, i32
  }
  func.func @transform_1(%arg0: i32, %arg1: i32) -> (i32, i32) {
    %c0_i32 = arith.constant 0 : i32
    %c0_i32_0 = arith.constant 0 : i32
    %c0_i32_1 = arith.constant 0 : i32
    return %c0_i32, %c0_i32_0 : i32, i32
  }
  func.func @transform_2(%arg0: i32, %arg1: i32) -> (i32, i32, i32) {
    %c0_i32 = arith.constant 0 : i32
    %c0_i32_0 = arith.constant 0 : i32
    return %arg0, %c0_i32, %arg1 : i32, i32, i32
  }
  func.func @transform_3(%arg0: i32, %arg1: i32) -> (i32, i32, i32) {
    %c0_i32 = arith.constant 0 : i32
    %c0_i32_0 = arith.constant 0 : i32
    return %arg0, %c0_i32, %arg1 : i32, i32, i32
  }
}

</mosaic_0001>

<llo_original>
// kernel: basic_conv1d.2
$region0: #{basic_conv1d.2}
  #allocation0 [shape = 'u32[]', space=smem, size = 0x4, offset = 0x4, fixed_abs, tag = 'smem constant byte address 0x4 - core index']
  #allocation1 [shape = 'u32[144,128]{1,0:T(1,128)}', space=vmem, size = 0x12000, scoped, tag = 'internal scratch']
  %s0 = inlined_call_operand.vmem [shape: f32[2,4,16], index: 0, kind: input, shape index: {}]
  %s1 = inlined_call_operand.vmem [shape: f32[4,1], index: 1, kind: output, shape index: {0}]
  %s2 = inlined_call_operand.vmem [shape: f32[4,4], index: 2, kind: output, shape index: {1}]
  %3 = xla_tuple %s1, %s2
  %s4 = sld [smem:[#allocation0]]
  $region49: #{basic_conv1d.2} parent=0
    _
  %s6 = ssub.s32 1, %s4
  %s7 = scalar_select 0, %s6, %s4
  loop: start=0, step=1, limit=4
  $region2: #{basic_conv1d.2} parent=0 // loop_pre_header
    _
  $region3: #{basic_conv1d.2} parent=0 // loop_header
    %s9 = sphi 0, %s13
    %p10 = scmp.ge.s32.totalorder %s9, 4
    %s16 = sphi 0, %s28
    %s17 = sphi 0, %s24
    %s18 = sphi 0, %s16
    %s19 = sphi 0, %s17
    %s20 = sphi 0, %s18
    %s21 = sphi 0, %s19
    %s33 = sphi 0, %s35
    %s36 = sphi 0, %s33
    %s37 = sphi 0, %s36
    %s53 = sphi 0, %s37
    %s57 = sphi 0, %s57
    %s59 = sphi 0, %s57
    %s60 = sphi 0, %s59
    %s74 = sphi 0, %s60
    %s78 = sphi 0, %s78
    %s80 = sphi 0, %s78
    %s81 = sphi 0, %s80
    %s95 = sphi 0, %s81
  $region4: #{basic_conv1d.2} parent=0 // loop_header_branch
    %12 = sbr.rel (%p10) target = $region8
  $region5: #{basic_conv1d.2} parent=0 // loop_body
    %s14 = ssub.s32 %s9, 1
    %s15 = ssub.s32 %s9, 2
    %s22 = sadd.s32 1, %s17
    %p23 = scmp.ge.s32.totalorder %s22, 1
    %s24 = scalar_select %p23, 0, %s22
    %s25 = sadd.s32 1, %s16
    %s26 = scalar_select %p23, %s25, %s16
    %p27 = scmp.ge.s32.totalorder %s26, 2
    %s28 = scalar_select %p27, 0, %s26
    %s29 = ssub.s32 %s16, %s28
    %s30 = ssub.s32 %s17, %s24
    %s31 = sor.u32 %s29, %s30
    %p32 = scmp.eq.s32.totalorder %s31, 0
    %s34 = sadd.s32 %s33, 1
    %s35 = scalar_select %p32, %s33, %s34
    %p38 = pneg %p32
    %p39 = scmp.eq.s32.totalorder %s9, 1
    %p40 = por %p38, %p39
    %p41 = scmp.ne.s32.totalorder %s33, %s36
    %p42 = scmp.eq.s32.totalorder %s9, 0
    %p43 = por %p41, %p42
    %p44 = scmp.ne.s32.totalorder %s33, %s36
    %p45 = scmp.eq.s32.totalorder %s14, 1
    %p46 = por %p44, %p45
    %p47 = scmp.ne.s32.totalorder %s36, %s37
    %p48 = scmp.eq.s32.totalorder %s14, 0
    %p49 = por %p47, %p48
    %p50 = scmp.ne.s32.totalorder %s36, %s37
    %p51 = scmp.eq.s32.totalorder %s15, 1
    %p52 = por %p50, %p51
    %p54 = scmp.ne.s32.totalorder %s37, %s53
    %p55 = scmp.eq.s32.totalorder %s15, 0
    %p56 = por %p54, %p55
    %s58 = sadd.s32 %s57, 1
    %p61 = scmp.eq.s32.totalorder %s9, 1
    %p62 = scmp.ne.s32.totalorder %s57, %s59
    %p63 = scmp.eq.s32.totalorder %s9, 0
    %p64 = por %p62, %p63
    %p65 = scmp.ne.s32.totalorder %s57, %s59
    %p66 = scmp.eq.s32.totalorder %s14, 1
    %p67 = por %p65, %p66
    %p68 = scmp.ne.s32.totalorder %s59, %s60
    %p69 = scmp.eq.s32.totalorder %s14, 0
    %p70 = por %p68, %p69
    %p71 = scmp.ne.s32.totalorder %s59, %s60
    %p72 = scmp.eq.s32.totalorder %s15, 1
    %p73 = por %p71, %p72
    %p75 = scmp.ne.s32.totalorder %s60, %s74
    %p76 = scmp.eq.s32.totalorder %s15, 0
    %p77 = por %p75, %p76
    %s79 = sadd.s32 %s78, 1
    %p82 = scmp.eq.s32.totalorder %s9, 1
    %p83 = scmp.ne.s32.totalorder %s78, %s80
    %p84 = scmp.eq.s32.totalorder %s9, 0
    %p85 = por %p83, %p84
    %p86 = scmp.ne.s32.totalorder %s78, %s80
    %p87 = scmp.eq.s32.totalorder %s14, 1
    %p88 = por %p86, %p87
    %p89 = scmp.ne.s32.totalorder %s80, %s81
    %p90 = scmp.eq.s32.totalorder %s14, 0
    %p91 = por %p89, %p90
    %p92 = scmp.ne.s32.totalorder %s80, %s81
    %p93 = scmp.eq.s32.totalorder %s15, 1
    %p94 = por %p92, %p93
    %p96 = scmp.ne.s32.totalorder %s81, %s95
    %p97 = scmp.eq.s32.totalorder %s15, 0
    %p98 = por %p96, %p97
    %p99 = scmp.le.s32.totalorder 1, %s9
    %p100 = scmp.lt.s32.totalorder %s9, 3
    %p101 = pnand %p99, %p100
    %p102 = pneg %p101
    // Predicated region
    $region9: #{basic_conv1d.2} parent=5 // pred_check
      _
    $region10: #{basic_conv1d.2} parent=5 // pred_check_branch
      %104 = sbr.rel (%p101) target = $region12
    $region11: #{basic_conv1d.2} parent=5 // pred_region
      %s105 = ssub.s32 %s9, 1
    $region12: #{basic_conv1d.2} parent=5 // pred_fallthru
      _
    %p106 = scmp.lt.s32.totalorder %s9, 2
    // Predicated region
    $region13: #{basic_conv1d.2} parent=5 // pred_check
      %p107 = pneg %p106
    $region14: #{basic_conv1d.2} parent=5 // pred_check_branch
      %109 = sbr.rel (%p107) target = $region16
    $region15: #{basic_conv1d.2} parent=5 // pred_region
      // Predicated region
      $region17: #{basic_conv1d.2} parent=15 // pred_check
        %p110 = pneg %p43
      $region18: #{basic_conv1d.2} parent=15 // pred_check_branch
        %112 = sbr.rel (%p110) target = $region20
      $region19: #{basic_conv1d.2} parent=15 // pred_region
        %p113 = scmp.lt.s32.totalorder %s16, 1
        %s114 = scalar_select %p113, %s16, 1
        %p115 = scmp.lt.s32.totalorder %s17, 0
        %s116 = scalar_select %p115, %s17, 0
        %s117 = sadd.s32 %s116, %s114
        %s118 = smul.addr %s117, 4
        %s119 = scalar_lea.vmem %s0, %s118
      $region20: #{basic_conv1d.2} parent=15 // pred_fallthru
        _
    $region16: #{basic_conv1d.2} parent=5 // pred_fallthru
      _
    %p120 = scmp.le.s32.totalorder 1, %s9
    %p121 = scmp.lt.s32.totalorder %s9, 3
    %p122 = pnand %p120, %p121
    %p123 = pneg %p122
    // Predicated region
    $region21: #{basic_conv1d.2} parent=5 // pred_check
      _
    $region22: #{basic_conv1d.2} parent=5 // pred_check_branch
      %125 = sbr.rel (%p122) target = $region24
    $region23: #{basic_conv1d.2} parent=5 // pred_region
      %s126 = ssub.s32 %s9, 1
      %p127 = scmp.lt.s32.totalorder %s18, 1
      %s128 = scalar_select %p127, %s18, 1
      %p129 = scmp.lt.s32.totalorder %s19, 0
      %s130 = scalar_select %p129, %s19, 0
      %s131 = sadd.s32 %s130, %s128
      %s132 = smul.addr %s131, 4
      %s133 = scalar_lea.vmem %s0, %s132
      %p134 = pneg %p49
      %p135 = pneg %p46
      %p136 = pneg %p70
      %p137 = pneg %p67
      %p138 = pneg %p91
      %p139 = pneg %p88
      %p140 = scmp.lt.s32.totalorder %s18, 1
      %s141 = scalar_select %p140, %s18, 1
      %p142 = scmp.lt.s32.totalorder %s19, 0
      %s143 = scalar_select %p142, %s19, 0
      %s144 = sadd.s32 %s143, %s141
      %s145 = smul.addr %s144, 4
      %s146 = scalar_lea.vmem %s0, %s145
      %p147 = scmp.eq.s32.totalorder %s18, 0
      %p148 = scmp.eq.s32.totalorder %s19, 0
      %p149 = pnand %p147, %p148
      %p150 = pneg %p149
      // Predicated region
      $region25: #{basic_conv1d.2} parent=23 // pred_check
        _
      $region26: #{basic_conv1d.2} parent=23 // pred_check_branch
        %152 = sbr.rel (%p149) target = $region28
      $region27: #{basic_conv1d.2} parent=23 // pred_region
        %vm153 = vcmask 3072
        %154 = vst.msk [vmem:[%s1] sm:$0xf] %vm153, 0.0
        %vm155 = vcmask 27648
        %156 = vst.msk [vmem:[%s2] sm:$0xf] %vm155, 0.0
      $region28: #{basic_conv1d.2} parent=23 // pred_fallthru
        _
      %v157 = vld [vmem:[%s146] sm:$0xf]
      %v158 = vld [vmem:[%s1] sm:$0xf]
      %vm159 = vcmask 125952
      %v160 = vsel %vm159, %v157, 0.0
      %161 = vadd.xlane.f32.xlu0 %v160
      %v162 = vpop.xlane.xlu0 %161
      %v163 = vadd.f32 %v158, %v162
      %vm164 = vcmask 3072
      %165 = vst.msk [vmem:[%s1] sm:$0xf] %vm164, %v163
      %v166 = vld [vmem:[%s2] sm:$0xf]
      %vm167 = vcmask 130048
      %v169 = vsel %vm167, %v157, 0
      %171 = vmatprep.subr.mxu0 0.0
      %172 = vmatpush1.xpose.msra.mxu0 0.0
      %173 = vmatprep.subr.mxu0 0.0
      %174 = vmatpush1.xpose.msra.mxu0 0.0
      %175 = vmatprep.subr.mxu0 0.0
      %176 = vmatpush1.xpose.msra.mxu0 0.0
      %177 = vmatprep.subr.mxu0 0.0
      %178 = vmatpush1.xpose.msra.mxu0 0.0
      %179 = vmatprep.subr.mxu0 0.0
      %180 = vmatpush1.xpose.msra.mxu0 0.0
      %181 = vmatprep.subr.mxu0 0.0
      %182 = vmatpush1.xpose.msra.mxu0 0.0
      %183 = vmatprep.subr.mxu0 0.0
      %184 = vmatpush1.xpose.msra.mxu0 0.0
      %185 = vmatprep.subr.mxu0 0.0
      %186 = vmatpush1.xpose.msra.mxu0 0.0
      %187 = vmatprep.subr.mxu0 0.0
      %188 = vmatpush1.xpose.msra.mxu0 0.0
      %189 = vmatprep.subr.mxu0 0.0
      %190 = vmatpush1.xpose.msra.mxu0 0.0
      %191 = vmatprep.subr.mxu0 0.0
      %192 = vmatpush1.xpose.msra.mxu0 0.0
      %193 = vmatprep.subr.mxu0 0.0
      %194 = vmatpush1.xpose.msra.mxu0 0.0
      %195 = vmatprep.subr.mxu0 0.0
      %196 = vmatpush1.xpose.msra.mxu0 0.0
      %197 = vmatprep.subr.mxu0 0.0
      %198 = vmatpush1.xpose.msra.mxu0 0.0
      %199 = vmatprep.subr.mxu0 0.0
      %200 = vmatpush1.xpose.msra.mxu0 0.0
      %201 = vmatprep.subr.mxu0 0.0
      %202 = vmatpush1.xpose.msra.mxu0 %v169
      %203 = vmatprep.subr.mxu0 0.0
      %204 = vmatpush2.xpose.msra.mxu0 0.0
      %205 = vmatprep.subr.mxu0 0.0
      %206 = vmatpush2.xpose.msra.mxu0 0.0
      %207 = vmatprep.subr.mxu0 0.0
      %208 = vmatpush2.xpose.msra.mxu0 0.0
      %209 = vmatprep.subr.mxu0 0.0
      %210 = vmatpush2.xpose.msra.mxu0 0.0
      %211 = vmatprep.subr.mxu0 0.0
      %212 = vmatpush2.xpose.msra.mxu0 0.0
      %213 = vmatprep.subr.mxu0 0.0
      %214 = vmatpush2.xpose.msra.mxu0 0.0
      %215 = vmatprep.subr.mxu0 0.0
      %216 = vmatpush2.xpose.msra.mxu0 0.0
      %217 = vmatprep.subr.mxu0 0.0
      %218 = vmatpush2.xpose.msra.mxu0 0.0
      %219 = vmatprep.subr.mxu0 0.0
      %220 = vmatpush2.xpose.msra.mxu0 0.0
      %221 = vmatprep.subr.mxu0 0.0
      %222 = vmatpush2.xpose.msra.mxu0 0.0
      %223 = vmatprep.subr.mxu0 0.0
      %224 = vmatpush2.xpose.msra.mxu0 0.0
      %225 = vmatprep.subr.mxu0 0.0
      %226 = vmatpush2.xpose.msra.mxu0 0.0
      %227 = vmatprep.subr.mxu0 0.0
      %228 = vmatpush2.xpose.msra.mxu0 0.0
      %229 = vmatprep.subr.mxu0 0.0
      %230 = vmatpush2.xpose.msra.mxu0 0.0
      %231 = vmatprep.subr.mxu0 0.0
      %232 = vmatpush2.xpose.msra.mxu0 0.0
      %233 = vmatprep.subr.mxu0 0.0
      %234 = vmatpush2.xpose.msra.mxu0 0.0
      %235 = vmatprep.mubr.f32.mxu0 0.0
      %236 = vmatmul.mubr.f32.gmra.mxu0 %v169
      %v237 = vpop.f32.mrf.mxu0
      %v238 = vadd.f32 0.0, %v237
      %v239 = vpop.f32.mrf.mxu0
      %240 = vdwg.mxu0
      %v241 = vadd.f32 %v166, %v238
      %vm242 = vcmask 27648
      %243 = vst.msk [vmem:[%s2] sm:$0xf] %vm242, %v241
      // Predicated region
      $region29: #{basic_conv1d.2} parent=23 // pred_check
        %p244 = pneg %p67
      $region30: #{basic_conv1d.2} parent=23 // pred_check_branch
        %246 = sbr.rel (%p244) target = $region32
      $region31: #{basic_conv1d.2} parent=23 // pred_region
        _
      $region32: #{basic_conv1d.2} parent=23 // pred_fallthru
        _
      // Predicated region
      $region33: #{basic_conv1d.2} parent=23 // pred_check
        %p247 = pneg %p88
      $region34: #{basic_conv1d.2} parent=23 // pred_check_branch
        %249 = sbr.rel (%p247) target = $region36
      $region35: #{basic_conv1d.2} parent=23 // pred_region
        _
      $region36: #{basic_conv1d.2} parent=23 // pred_fallthru
        _
      // Predicated region
      $region37: #{basic_conv1d.2} parent=23 // pred_check
        %p250 = pneg %p67
      $region38: #{basic_conv1d.2} parent=23 // pred_check_branch
        %252 = sbr.rel (%p250) target = $region40
      $region39: #{basic_conv1d.2} parent=23 // pred_region
        _
      $region40: #{basic_conv1d.2} parent=23 // pred_fallthru
        _
      // Predicated region
      $region41: #{basic_conv1d.2} parent=23 // pred_check
        %p253 = pneg %p88
      $region42: #{basic_conv1d.2} parent=23 // pred_check_branch
        %255 = sbr.rel (%p253) target = $region44
      $region43: #{basic_conv1d.2} parent=23 // pred_region
        _
      $region44: #{basic_conv1d.2} parent=23 // pred_fallthru
        _
    $region24: #{basic_conv1d.2} parent=5 // pred_fallthru
      _
    %p256 = scmp.le.s32.totalorder 2, %s9
    // Predicated region
    $region45: #{basic_conv1d.2} parent=5 // pred_check
      %p257 = pneg %p256
    $region46: #{basic_conv1d.2} parent=5 // pred_check_branch
      %259 = sbr.rel (%p257) target = $region48
    $region47: #{basic_conv1d.2} parent=5 // pred_region
      %s260 = ssub.s32 %s9, 2
    $region48: #{basic_conv1d.2} parent=5 // pred_fallthru
      _
  $region6: #{basic_conv1d.2} parent=0 // loop_footer
    %s13 = sadd.s32 1, %s9
  $region7: #{basic_conv1d.2} parent=0 // loop_footer_branch
    %8 = sbr.rel target = $region3
  $region8: #{basic_conv1d.2} parent=0 // loop_exit
    _

// kernel: basic_conv1d.3
$region0: #{basic_conv1d.3}
  #allocation0 [shape = 'u32[]', space=smem, size = 0x4, offset = 0x4, fixed_abs, tag = 'smem constant byte address 0x4 - core index']
  #allocation1 [shape = 'u32[144,128]{1,0:T(1,128)}', space=vmem, size = 0x12000, scoped, tag = 'internal scratch']
  %s0 = inlined_call_operand.vmem [shape: f32[8,4], index: 0, kind: input, shape index: {}]
  %s1 = inlined_call_operand.vmem [shape: f32[8,1], index: 1, kind: input, shape index: {}]
  %s2 = inlined_call_operand.vmem [shape: f32[2,4,16], index: 2, kind: input, shape index: {}]
  %s3 = inlined_call_operand.hbm [shape: f32[2,8,16], index: 3, kind: output, shape index: {}]
  %s4 = sld [smem:[#allocation0]]
  $region45: #{basic_conv1d.3} parent=0
    _
  %s6 = ssub.s32 1, %s4
  %s7 = scalar_select 0, %s6, %s4
  $region1: #{basic_conv1d.3} parent=0
    #allocation2 [shape = 'u8[8192]{0}', space=vmem, size = 0x2000, scoped, tag = 'output window, operand 0']
    #allocation3 [shape = 's32[2]{0}', space=sflag, size = 0x8, scoped, tag = 'scoped memory for basic_conv1d.3']
    %8 = vsyncpa [#allocation3], 0
    %s9 = scalar_lea.sflag [#allocation3], 1
    %10 = vsyncpa %s9, 0
    loop: start=0, step=1, limit=4
    $region2: #{basic_conv1d.3} parent=1 // loop_pre_header
      _
    $region3: #{basic_conv1d.3} parent=1 // loop_header
      %s12 = sphi 0, %s16
      %p13 = scmp.ge.s32.totalorder %s12, 4
      %s19 = sphi 0, %s31
      %s20 = sphi 0, %s27
      %s21 = sphi 0, %s19
      %s22 = sphi 0, %s20
      %s23 = sphi 0, %s21
      %s24 = sphi 0, %s22
      %s32 = sphi 0, %s32
      %s34 = sphi 0, %s32
      %s35 = sphi 0, %s34
      %s49 = sphi 0, %s35
      %s53 = sphi 0, %s53
      %s55 = sphi 0, %s53
      %s56 = sphi 0, %s55
      %s70 = sphi 0, %s56
      %s78 = sphi 0, %s80
      %s81 = sphi 0, %s78
      %s82 = sphi 0, %s81
      %s98 = sphi 0, %s82
      %s106 = sphi 0, %s108
      %s109 = sphi 0, %s106
      %s110 = sphi 0, %s109
      %s126 = sphi 0, %s110
    $region4: #{basic_conv1d.3} parent=1 // loop_header_branch
      %15 = sbr.rel (%p13) target = $region8
    $region5: #{basic_conv1d.3} parent=1 // loop_body
      %s17 = ssub.s32 %s12, 1
      %s18 = ssub.s32 %s12, 2
      %s25 = sadd.s32 1, %s20
      %p26 = scmp.ge.s32.totalorder %s25, 1
      %s27 = scalar_select %p26, 0, %s25
      %s28 = sadd.s32 1, %s19
      %s29 = scalar_select %p26, %s28, %s19
      %p30 = scmp.ge.s32.totalorder %s29, 2
      %s31 = scalar_select %p30, 0, %s29
      %s33 = sadd.s32 %s32, 1
      %p36 = scmp.eq.s32.totalorder %s12, 1
      %p37 = scmp.ne.s32.totalorder %s32, %s34
      %p38 = scmp.eq.s32.totalorder %s12, 0
      %p39 = por %p37, %p38
      %p40 = scmp.ne.s32.totalorder %s32, %s34
      %p41 = scmp.eq.s32.totalorder %s17, 1
      %p42 = por %p40, %p41
      %p43 = scmp.ne.s32.totalorder %s34, %s35
      %p44 = scmp.eq.s32.totalorder %s17, 0
      %p45 = por %p43, %p44
      %p46 = scmp.ne.s32.totalorder %s34, %s35
      %p47 = scmp.eq.s32.totalorder %s18, 1
      %p48 = por %p46, %p47
      %p50 = scmp.ne.s32.totalorder %s35, %s49
      %p51 = scmp.eq.s32.totalorder %s18, 0
      %p52 = por %p50, %p51
      %s54 = sadd.s32 %s53, 1
      %p57 = scmp.eq.s32.totalorder %s12, 1
      %p58 = scmp.ne.s32.totalorder %s53, %s55
      %p59 = scmp.eq.s32.totalorder %s12, 0
      %p60 = por %p58, %p59
      %p61 = scmp.ne.s32.totalorder %s53, %s55
      %p62 = scmp.eq.s32.totalorder %s17, 1
      %p63 = por %p61, %p62
      %p64 = scmp.ne.s32.totalorder %s55, %s56
      %p65 = scmp.eq.s32.totalorder %s17, 0
      %p66 = por %p64, %p65
      %p67 = scmp.ne.s32.totalorder %s55, %s56
      %p68 = scmp.eq.s32.totalorder %s18, 1
      %p69 = por %p67, %p68
      %p71 = scmp.ne.s32.totalorder %s56, %s70
      %p72 = scmp.eq.s32.totalorder %s18, 0
      %p73 = por %p71, %p72
      %s74 = ssub.s32 %s19, %s31
      %s75 = ssub.s32 %s20, %s27
      %s76 = sor.u32 %s74, %s75
      %p77 = scmp.eq.s32.totalorder %s76, 0
      %s79 = sadd.s32 %s78, 1
      %s80 = scalar_select %p77, %s78, %s79
      %p83 = pneg %p77
      %p84 = scmp.eq.s32.totalorder %s12, 1
      %p85 = por %p83, %p84
      %p86 = scmp.ne.s32.totalorder %s78, %s81
      %p87 = scmp.eq.s32.totalorder %s12, 0
      %p88 = por %p86, %p87
      %p89 = scmp.ne.s32.totalorder %s78, %s81
      %p90 = scmp.eq.s32.totalorder %s17, 1
      %p91 = por %p89, %p90
      %p92 = scmp.ne.s32.totalorder %s81, %s82
      %p93 = scmp.eq.s32.totalorder %s17, 0
      %p94 = por %p92, %p93
      %p95 = scmp.ne.s32.totalorder %s81, %s82
      %p96 = scmp.eq.s32.totalorder %s18, 1
      %p97 = por %p95, %p96
      %p99 = scmp.ne.s32.totalorder %s82, %s98
      %p100 = scmp.eq.s32.totalorder %s18, 0
      %p101 = por %p99, %p100
      %s102 = ssub.s32 %s19, %s31
      %s103 = ssub.s32 %s20, %s27
      %s104 = sor.u32 %s102, %s103
      %p105 = scmp.eq.s32.totalorder %s104, 0
      %s107 = sadd.s32 %s106, 1
      %s108 = scalar_select %p105, %s106, %s107
      %p111 = pneg %p105
      %p112 = scmp.eq.s32.totalorder %s12, 1
      %p113 = por %p111, %p112
      %p114 = scmp.ne.s32.totalorder %s106, %s109
      %p115 = scmp.eq.s32.totalorder %s12, 0
      %p116 = por %p114, %p115
      %p117 = scmp.ne.s32.totalorder %s106, %s109
      %p118 = scmp.eq.s32.totalorder %s17, 1
      %p119 = por %p117, %p118
      %p120 = scmp.ne.s32.totalorder %s109, %s110
      %p121 = scmp.eq.s32.totalorder %s17, 0
      %p122 = por %p120, %p121
      %p123 = scmp.ne.s32.totalorder %s109, %s110
      %p124 = scmp.eq.s32.totalorder %s18, 1
      %p125 = por %p123, %p124
      %p127 = scmp.ne.s32.totalorder %s110, %s126
      %p128 = scmp.eq.s32.totalorder %s18, 0
      %p129 = por %p127, %p128
      %p130 = scmp.le.s32.totalorder 1, %s12
      %p131 = scmp.lt.s32.totalorder %s12, 3
      %p132 = pnand %p130, %p131
      %p133 = pneg %p132
      // Predicated region
      $region9: #{basic_conv1d.3} parent=5 // pred_check
        _
      $region10: #{basic_conv1d.3} parent=5 // pred_check_branch
        %135 = sbr.rel (%p132) target = $region12
      $region11: #{basic_conv1d.3} parent=5 // pred_region
        %s136 = ssub.s32 %s12, 1
        // Predicated region
        $region13: #{basic_conv1d.3} parent=11 // pred_check
          %p137 = pneg %p45
        $region14: #{basic_conv1d.3} parent=11 // pred_check_branch
          %139 = sbr.rel (%p137) target = $region16
        $region15: #{basic_conv1d.3} parent=11 // pred_region
          _
        $region16: #{basic_conv1d.3} parent=11 // pred_fallthru
          _
        // Predicated region
        $region17: #{basic_conv1d.3} parent=11 // pred_check
          %p140 = pneg %p66
        $region18: #{basic_conv1d.3} parent=11 // pred_check_branch
          %142 = sbr.rel (%p140) target = $region20
        $region19: #{basic_conv1d.3} parent=11 // pred_region
          _
        $region20: #{basic_conv1d.3} parent=11 // pred_fallthru
          _
      $region12: #{basic_conv1d.3} parent=5 // pred_fallthru
        _
      %p143 = scmp.lt.s32.totalorder %s12, 2
      // Predicated region
      $region21: #{basic_conv1d.3} parent=5 // pred_check
        %p144 = pneg %p143
      $region22: #{basic_conv1d.3} parent=5 // pred_check_branch
        %146 = sbr.rel (%p144) target = $region24
      $region23: #{basic_conv1d.3} parent=5 // pred_region
        // Predicated region
        $region25: #{basic_conv1d.3} parent=23 // pred_check
          %p147 = pneg %p88
        $region26: #{basic_conv1d.3} parent=23 // pred_check_branch
          %149 = sbr.rel (%p147) target = $region28
        $region27: #{basic_conv1d.3} parent=23 // pred_region
          %p150 = scmp.lt.s32.totalorder %s19, 1
          %s151 = scalar_select %p150, %s19, 1
          %p152 = scmp.lt.s32.totalorder %s20, 0
          %s153 = scalar_select %p152, %s20, 0
          %s154 = sadd.s32 %s153, %s151
          %s155 = smul.addr %s154, 4
          %s156 = scalar_lea.vmem %s2, %s155
        $region28: #{basic_conv1d.3} parent=23 // pred_fallthru
          _
      $region24: #{basic_conv1d.3} parent=5 // pred_fallthru
        _
      %p157 = scmp.le.s32.totalorder 1, %s12
      %p158 = scmp.lt.s32.totalorder %s12, 3
      %p159 = pnand %p157, %p158
      %p160 = pneg %p159
      // Predicated region
      $region29: #{basic_conv1d.3} parent=5 // pred_check
        _
      $region30: #{basic_conv1d.3} parent=5 // pred_check_branch
        %162 = sbr.rel (%p159) target = $region32
      $region31: #{basic_conv1d.3} parent=5 // pred_region
        %s163 = ssub.s32 %s12, 1
        %p164 = pneg %p45
        %p165 = pneg %p42
        %p166 = pneg %p66
        %p167 = pneg %p63
        %p168 = scmp.lt.s32.totalorder %s21, 1
        %s169 = scalar_select %p168, %s21, 1
        %p170 = scmp.lt.s32.totalorder %s22, 0
        %s171 = scalar_select %p170, %s22, 0
        %s172 = sadd.s32 %s171, %s169
        %s173 = smul.addr %s172, 4
        %s174 = scalar_lea.vmem %s2, %s173
        %p175 = pneg %p94
        %p176 = pneg %p91
        %p177 = pneg %p122
        %p178 = pneg %p119
        %s179 = sand.u32 %s109, 1
        %s180 = scalar_lea.sflag [#allocation3], %s179
        %s181 = sand.u32 %s109, 1
        %s182 = smul.addr %s181, 8
        %s183 = scalar_lea.vmem [#allocation2], %s182
        %p184 = scmp.lt.s32.totalorder %s21, 1
        %s185 = scalar_select %p184, %s21, 1
        %p186 = scmp.lt.s32.totalorder %s22, 0
        %s187 = scalar_select %p186, %s22, 0
        %s188 = sadd.s32 %s187, %s185
        %s189 = smul.addr %s188, 4
        %s190 = scalar_lea.vmem %s2, %s189
        %v191 = vld [vmem:[%s190] sm:$0xf]
        %v192 = vld [vmem:[%s0] sm:$0xff]
        %v193 = vld [vmem:[%s1] sm:$0xff]
        %195 = vset.pattern.permute.xlu0 0
        %196 = vperm.xlu0 %195, %v193
        %v197 = vpop.permute.xlu0 %196
        %vm199 = vcmask 31744
        %v201 = vsel %vm199, %v192, 0
        %vm203 = vcmask 1043456
        %v205 = vsel %vm203, %v191, 0
        %207 = vmatprep.subr.mxu0 0.0
        %208 = vmatpush1.msra.mxu0 0.0
        %209 = vmatprep.subr.mxu0 0.0
        %210 = vmatpush1.msra.mxu0 0.0
        %211 = vmatprep.subr.mxu0 0.0
        %212 = vmatpush1.msra.mxu0 0.0
        %213 = vmatprep.subr.mxu0 0.0
        %214 = vmatpush1.msra.mxu0 0.0
        %215 = vmatprep.subr.mxu0 0.0
        %216 = vmatpush1.msra.mxu0 0.0
        %217 = vmatprep.subr.mxu0 0.0
        %218 = vmatpush1.msra.mxu0 0.0
        %219 = vmatprep.subr.mxu0 0.0
        %220 = vmatpush1.msra.mxu0 0.0
        %221 = vmatprep.subr.mxu0 0.0
        %222 = vmatpush1.msra.mxu0 0.0
        %223 = vmatprep.subr.mxu0 0.0
        %224 = vmatpush1.msra.mxu0 0.0
        %225 = vmatprep.subr.mxu0 0.0
        %226 = vmatpush1.msra.mxu0 0.0
        %227 = vmatprep.subr.mxu0 0.0
        %228 = vmatpush1.msra.mxu0 0.0
        %229 = vmatprep.subr.mxu0 0.0
        %230 = vmatpush1.msra.mxu0 0.0
        %231 = vmatprep.subr.mxu0 0.0
        %232 = vmatpush1.msra.mxu0 0.0
        %233 = vmatprep.subr.mxu0 0.0
        %234 = vmatpush1.msra.mxu0 0.0
        %235 = vmatprep.subr.mxu0 0.0
        %236 = vmatpush1.msra.mxu0 0.0
        %237 = vmatprep.subr.mxu0 0.0
        %238 = vmatpush1.msra.mxu0 %v205
        %239 = vmatprep.subr.mxu0 0.0
        %240 = vmatpush2.msra.mxu0 0.0
        %241 = vmatprep.subr.mxu0 0.0
        %242 = vmatpush2.msra.mxu0 0.0
        %243 = vmatprep.subr.mxu0 0.0
        %244 = vmatpush2.msra.mxu0 0.0
        %245 = vmatprep.subr.mxu0 0.0
        %246 = vmatpush2.msra.mxu0 0.0
        %247 = vmatprep.subr.mxu0 0.0
        %248 = vmatpush2.msra.mxu0 0.0
        %249 = vmatprep.subr.mxu0 0.0
        %250 = vmatpush2.msra.mxu0 0.0
        %251 = vmatprep.subr.mxu0 0.0
        %252 = vmatpush2.msra.mxu0 0.0
        %253 = vmatprep.subr.mxu0 0.0
        %254 = vmatpush2.msra.mxu0 0.0
        %255 = vmatprep.subr.mxu0 0.0
        %256 = vmatpush2.msra.mxu0 0.0
        %257 = vmatprep.subr.mxu0 0.0
        %258 = vmatpush2.msra.mxu0 0.0
        %259 = vmatprep.subr.mxu0 0.0
        %260 = vmatpush2.msra.mxu0 0.0
        %261 = vmatprep.subr.mxu0 0.0
        %262 = vmatpush2.msra.mxu0 0.0
        %263 = vmatprep.subr.mxu0 0.0
        %264 = vmatpush2.msra.mxu0 0.0
        %265 = vmatprep.subr.mxu0 0.0
        %266 = vmatpush2.msra.mxu0 0.0
        %267 = vmatprep.subr.mxu0 0.0
        %268 = vmatpush2.msra.mxu0 0.0
        %269 = vmatprep.subr.mxu0 0.0
        %270 = vmatpush2.msra.mxu0 0.0
        %271 = vmatprep.mubr.f32.mxu0 0.0
        %272 = vmatmul.mubr.f32.gmra.mxu0 %v201
        %v273 = vpop.f32.mrf.mxu0
        %v274 = vadd.f32 %v197, %v273
        %v275 = vpop.f32.mrf.mxu0
        %276 = vdwg.mxu0
        %v277 = vmin.f32 %v274, 20.0
        %v278 = vmul.f32 %v277, 1.442695
        %v279 = vpow.pop %v278
        %v280 = vadd.f32 %v279, 1.0
        %v281 = vmul.f32 %v280, %v280
        %v282 = vsub.f32 %v281, 1.0
        %v283 = vmul.f32 %v274, %v282
        %v284 = vadd.f32 %v281, 1.0
        %v285 = vrcp.pop %v284
        %v286 = vmul.f32 %v283, %v285
        %vm287 = vcmask 130048
        %288 = vst.msk [vmem:[%s183] sm:$0xff] %vm287, %v286
        %s289 = sand.u32 %s109, 1
        %s290 = scalar_lea.sflag [#allocation3], %s289
        %s291 = sand.u32 %s109, 1
        %s292 = smul.addr %s291, 8
        %s293 = scalar_lea.vmem [#allocation2], %s292
        // Predicated region
        $region33: #{basic_conv1d.3} parent=31 // pred_check
          %p294 = pneg %p119
        $region34: #{basic_conv1d.3} parent=31 // pred_check_branch
          %296 = sbr.rel (%p294) target = $region36
        $region35: #{basic_conv1d.3} parent=31 // pred_region
          %s298 = ssub.s32 128, 128
          %299 = vsyncadd %s290, %s298
          %s300 = sadd.s32 %s22, %s21
          %s301 = smul.addr %s300, 128
          %s302 = scalar_lea.hbm %s3, %s301
          %s304 = sshll.u32 %s293, 4
          %s305 = int_to_ptr.vmem [resolvable:$true] %s304
          %307 = dma.vmem_to_hbm [thread:$0]  %s305, 128, %s302, %s290
        $region36: #{basic_conv1d.3} parent=31 // pred_fallthru
          _
      $region32: #{basic_conv1d.3} parent=5 // pred_fallthru
        _
      %p308 = scmp.le.s32.totalorder 2, %s12
      // Predicated region
      $region37: #{basic_conv1d.3} parent=5 // pred_check
        %p309 = pneg %p308
      $region38: #{basic_conv1d.3} parent=5 // pred_check_branch
        %311 = sbr.rel (%p309) target = $region40
      $region39: #{basic_conv1d.3} parent=5 // pred_region
        %s312 = ssub.s32 %s12, 2
        // Predicated region
        $region41: #{basic_conv1d.3} parent=39 // pred_check
          %p313 = pneg %p125
        $region42: #{basic_conv1d.3} parent=39 // pred_check_branch
          %315 = sbr.rel (%p313) target = $region44
        $region43: #{basic_conv1d.3} parent=39 // pred_region
          %s316 = sand.u32 %s110, 1
          %s317 = scalar_lea.sflag [#allocation3], %s316
          %s318 = sand.u32 %s110, 1
          %s319 = smul.addr %s318, 8
          %s320 = scalar_lea.vmem [#allocation2], %s319
          %321 = dma.done %s317, 128
        $region44: #{basic_conv1d.3} parent=39 // pred_fallthru
          _
      $region40: #{basic_conv1d.3} parent=5 // pred_fallthru
        _
    $region6: #{basic_conv1d.3} parent=1 // loop_footer
      %s16 = sadd.s32 1, %s12
    $region7: #{basic_conv1d.3} parent=1 // loop_footer_branch
      %11 = sbr.rel target = $region3
    $region8: #{basic_conv1d.3} parent=1 // loop_exit
      _
    %322 = vsyncpa [#allocation3], 1
    %s323 = scalar_lea.sflag [#allocation3], 1
    %324 = vsyncpa %s323, 1

</llo_original>
